<compile_context>
chip_gen: v6e
topology: v6e:2x2x1
jax: 0.10.0
libtpu: 0.0.40
codegen_flags: <defaults>
</compile_context>

<pallas_src>
import math

import jax
import jax.numpy as jnp
from jax.experimental import pallas as pl
from jax.experimental.pallas import tpu as pltpu


# --------------------------------------------------------------------------
# Small helpers
# --------------------------------------------------------------------------
def _sublane_multiple(dtype):
    return {4: 8, 2: 16, 1: 32}.get(jnp.dtype(dtype).itemsize, 8)


def _tpu_generation():
    try:
        kind = jax.devices()[0].device_kind.lower()
    except Exception:
        return "unknown"
    for tag in ("v7", "v6", "v5e", "v5 lite", "v5lite", "v5", "v4"):
        if tag in kind:
            return tag
    return "unknown"


def _vmem_budget_bytes(gen):
    # Leave headroom below physical VMEM (per TensorCore — on v7x each of the
    # 2 TCs holds its own copy of resident weights, so budget is per-TC).
    if gen == "v7":
        return 48 << 20          # 64 MiB physical; leave compiler scratch room
    if gen in ("v6", "v5e", "v5 lite", "v5lite", "v5", "v4"):
        return 100 << 20         # 128 MiB physical
    return 32 << 20              # unknown chip: stay conservative


def _choose_tb(batch, per_row_bytes, avail_bytes, sublane, target):
    tb = int(min(max(avail_bytes, 0) // max(per_row_bytes, 1), target, batch))
    if tb >= batch:
        return batch                         # single (possibly full-dim) block
    tb = (tb // sublane) * sublane           # dtype-aligned sublane multiple
    return max(tb, min(sublane, batch))


# --------------------------------------------------------------------------
# Kernels
# --------------------------------------------------------------------------
def _chain_kernel(x_ref, ut_ref, wt_ref, vt_ref, b_ref, o_ref):
    # y = (((x @ U^T) @ W^T) @ V^T) + (V @ b)   -- bias at the end so the three
    # MXU ops chain back-to-back; bias add overlaps the output cast/store.
    cdt = ut_ref.dtype
    h = jnp.dot(x_ref[...].astype(cdt), ut_ref[...],
                preferred_element_type=jnp.float32)
    h = jnp.dot(h.astype(cdt), wt_ref[...], preferred_element_type=jnp.float32)
    y = jnp.dot(h.astype(cdt), vt_ref[...], preferred_element_type=jnp.float32)
    o_ref[...] = (y + b_ref[...]).astype(o_ref.dtype)


def _folded_kernel(x_ref, wt_ref, b_ref, o_ref):
    # y = x @ (V W U)^T + (V b)
    cdt = wt_ref.dtype
    y = jnp.dot(x_ref[...].astype(cdt), wt_ref[...],
                preferred_element_type=jnp.float32)
    o_ref[...] = (y + b_ref[...]).astype(o_ref.dtype)


def _folded_ktiled_kernel(x_ref, wt_ref, b_ref, o_ref, acc_ref):
    # Reduction over IN tiles with an f32 VMEM accumulator (weights too big to
    # stay resident).  k is the inner ("arbitrary") grid axis.
    cdt = wt_ref.dtype
    k = pl.program_id(1)

    @pl.when(k == 0)
    def _():
        acc_ref[...] = jnp.zeros_like(acc_ref)

    acc_ref[...] += jnp.dot(x_ref[...].astype(cdt), wt_ref[...],
                            preferred_element_type=jnp.float32)

    @pl.when(k == pl.num_programs(1) - 1)
    def _():
        o_ref[...] = (acc_ref[...] + b_ref[...]).astype(o_ref.dtype)


# --------------------------------------------------------------------------
# One-time weight preprocessing (hoisted out of the per-call path)
# --------------------------------------------------------------------------
def prepare_share_linear_params(u_weight, w_weight, w_bias, v_weight, *,
                                compute_dtype=jnp.bfloat16, fold_weights=False):
    """PyTorch layouts: u_weight (in,in), w_weight (out,in), w_bias (out,),
    v_weight (out,out).  Call once and reuse the result with
    share_linear_apply(); all transposes / folds / casts happen here.

    fold_weights=True folds ((x U^T) W^T + b) V^T into x (V W U)^T + (V b)
    (single MXU pass; preferred for inference / frozen weights).
    """
    # TODO(synk): the sigmoid=True IdentityLinear variant (weight = sigmoid(temp*W))
    # is not implemented; the module's default sigmoid=False path is covered.
    cdt = jnp.dtype(compute_dtype)
    in_f = int(u_weight.shape[0])
    out_f = int(w_weight.shape[0])
    v32 = v_weight.astype(jnp.float32)
    bias_folded = (v32 @ w_bias.astype(jnp.float32)).reshape(1, out_f)   # V @ b, f32
    if fold_weights:
        w_fold = v32 @ w_weight.astype(jnp.float32) @ u_weight.astype(jnp.float32)
        return dict(kind="folded", in_features=in_f, out_features=out_f,
                    compute_dtype=cdt,
                    wt=jnp.asarray(w_fold.T, cdt),            # (in, out)
                    bias=bias_folded)
    return dict(kind="chain", in_features=in_f, out_features=out_f,
                compute_dtype=cdt,
                ut=jnp.asarray(u_weight.T, cdt),              # (in, in)
                wt=jnp.asarray(w_weight.T, cdt),              # (in, out)
                vt=jnp.asarray(v_weight.T, cdt),              # (out, out)
                bias=bias_folded)                             # (1, out), f32


# --------------------------------------------------------------------------
# Kernel launch
# --------------------------------------------------------------------------
def share_linear_apply(x, params, *, batch_tile=None, vmem_limit_bytes=None,
                       single_buffer_weights=True):
    """x: (B, in_features).  Returns (B, out_features) in x.dtype."""
    B, IN = x.shape
    assert IN == params["in_features"], "in_features mismatch"
    OUT = params["out_features"]
    cdt = params["compute_dtype"]
    out_dtype = x.dtype
    csize = jnp.dtype(cdt).itemsize
    xsize = jnp.dtype(x.dtype).itemsize
    osize = jnp.dtype(out_dtype).itemsize
    folded = params["kind"] == "folded"

    gen = _tpu_generation()
    budget = int(vmem_limit_bytes) if vmem_limit_bytes is not None \
        else _vmem_budget_bytes(gen)
    sub = max(_sublane_multiple(cdt), _sublane_multiple(x.dtype))
    target = batch_tile if batch_tile is not None else (512 if gen == "v7" else 1024)

    # ---- resident-weight sizing (no double-counted buffering) -------------
    wbuf = 1 if single_buffer_weights else 2
    if folded:
        weight_bytes = (IN * OUT * csize + OUT * 4) * wbuf
        extra_f32_per_row = 4 * OUT                       # f32 matmul result
    else:
        weight_bytes = ((IN * IN + IN * OUT + OUT * OUT) * csize + OUT * 4) * wbuf
        extra_f32_per_row = 4 * (IN + 2 * OUT)            # f32 intermediates
    per_row = 2 * IN * xsize + 2 * OUT * osize + extra_f32_per_row  # x/out dbl-buffered
    headroom = 2 << 20

    TB = _choose_tb(B, per_row, budget - weight_bytes - headroom, sub, target)
    vmem_need = weight_bytes + TB * per_row + headroom
    resident_fits = vmem_need <= budget

    def _weight_spec(shape, index_map, single):
        if single:
            return pl.BlockSpec(shape, index_map, pipeline_mode=pl.Buffered(1))
        return pl.BlockSpec(shape, index_map, )

    # ---- resident path (weights live in VMEM across the whole batch) ------
    if resident_fits:
        nb = int(pl.cdiv(B, TB))
        vmem_lim = int(min(budget, max(vmem_need, 16 << 20)))
        x_spec = pl.BlockSpec((TB, IN), lambda i: (i, 0))
        o_spec = pl.BlockSpec((TB, OUT), lambda i: (i, 0))

        if folded:
            kernel = _folded_kernel
            operands = (x, params["wt"], params["bias"])
            wshapes = [(IN, OUT), (1, OUT)]
        else:
            kernel = _chain_kernel
            operands = (x, params["ut"], params["wt"], params["vt"], params["bias"])
            wshapes = [(IN, IN), (IN, OUT), (OUT, OUT), (1, OUT)]

        def run(single):
            in_specs = [x_spec] + [_weight_spec(s, lambda i: (0, 0), single)
                                   for s in wshapes]
            return pl.pallas_call(
                kernel,
                out_shape=jax.ShapeDtypeStruct((B, OUT), out_dtype),
                grid=(nb,),
                in_specs=in_specs,
                out_specs=o_spec,
                compiler_params=pltpu.CompilerParams(
                    dimension_semantics=("parallel",),
                    vmem_limit_bytes=vmem_lim),
            )(*operands)

        if not single_buffer_weights:
            return run(False)
        try:
            return run(True)
        except Exception:
            # Buffered(1) not supported on this jax build -> default buffering.
            return run(False)

    # ---- fallback: weights do not fit the per-TC VMEM budget --------------
    if not folded:
        # TODO(synk): IN/OUT reduction grid for the unfolded 3-matmul chain.
        raise ValueError(
            f"ShareLinear chain weights ({weight_bytes} B) exceed the per-core "
            f"VMEM budget ({budget} B); use fold_weights=True (K-tiled path).")
    if IN % 128 != 0:
        # TODO(synk): masked K-edge handling for the reduction path.
        raise NotImplementedError(
            "K-tiled fallback requires in_features % 128 == 0.")

    tk = 128
    for cand in (512, 384, 256, 128):
        if IN % cand == 0:
            tk = cand
            break
    nk = IN // tk
    per_row_k = 2 * tk * xsize + 2 * OUT * osize + 4 * OUT      # + f32 accumulator
    wt_stream_bytes = 2 * tk * OUT * csize + OUT * 4            # wt double-buffered
    TB = _choose_tb(B, per_row_k, budget - wt_stream_bytes - headroom, sub, target)
    nb = int(pl.cdiv(B, TB))
    vmem_need = wt_stream_bytes + TB * per_row_k + headroom
    vmem_lim = int(min(budget, max(vmem_need, 16 << 20)))

    def run_ktiled(single):
        return pl.pallas_call(
            _folded_ktiled_kernel,
            out_shape=jax.ShapeDtypeStruct((B, OUT), out_dtype),
            grid=(nb, nk),
            in_specs=[pl.BlockSpec((TB, tk), lambda i, k: (i, k)),
                      pl.BlockSpec((tk, OUT), lambda i, k: (k, 0)),
                      _weight_spec((1, OUT), lambda i, k: (0, 0), single)],
            out_specs=pl.BlockSpec((TB, OUT), lambda i, k: (i, 0)),
            scratch_shapes=[pltpu.VMEM((TB, OUT), jnp.float32)],
            compiler_params=pltpu.CompilerParams(
                dimension_semantics=("parallel", "arbitrary"),
                vmem_limit_bytes=vmem_lim),
        )(x, params["wt"], params["bias"])

    if not single_buffer_weights:
        return run_ktiled(False)
    try:
        return run_ktiled(True)
    except Exception:
        return run_ktiled(False)


def share_linear(x, u_weight, w_weight, w_bias, v_weight, *,
                 compute_dtype=jnp.bfloat16, fold_weights=False, **apply_kwargs):
    """One-off convenience wrapper.  Repeated callers should call
    prepare_share_linear_params() once and reuse it with share_linear_apply()
    so weight transposes / folds are not re-done on every call."""
    params = prepare_share_linear_params(u_weight, w_weight, w_bias, v_weight,
                                         compute_dtype=compute_dtype,
                                         fold_weights=fold_weights)
    return share_linear_apply(x, params, **apply_kwargs)


# --------------------------------------------------------------------------
# Parameter init mirroring the PyTorch module (sigmoid=False path)
# --------------------------------------------------------------------------
def init_share_linear_params(key, in_features, out_features, dtype=jnp.float32):
    k_w, k_b = jax.random.split(key)
    bound = 1.0 / math.sqrt(in_features)            # nn.Linear kaiming-uniform bound
    w_weight = jax.random.uniform(k_w, (out_features, in_features),
                                  minval=-bound, maxval=bound, dtype=dtype)
    w_bias = jax.random.uniform(k_b, (out_features,),
                                minval=-bound, maxval=bound, dtype=dtype)
    u_weight = jnp.eye(in_features, dtype=dtype)    # IdentityLinear: init.eye_
    v_weight = jnp.eye(out_features, dtype=dtype)
    return u_weight, w_weight, w_bias, v_weight


if __name__ == "__main__":
    key = jax.random.PRNGKey(0)
    k_x, k_p = jax.random.split(key)

    batch, in_features, out_features = 8, 32, 64
    x = jax.random.normal(k_x, (batch, in_features), dtype=jnp.float32)
    u_w, w_w, w_b, v_w = init_share_linear_params(k_p, in_features, out_features)

    # Pure-JAX reference of the module's forward.
    ref = ((x @ u_w.T) @ w_w.T + w_b) @ v_w.T

    # 1) Exact-semantics fused 3-matmul chain, f32 operands (prepare once, apply).
    p_f32 = prepare_share_linear_params(u_w, w_w, w_b, v_w,
                                        compute_dtype=jnp.float32)
    y = jax.block_until_ready(share_linear_apply(x, p_f32))
    assert y.shape == (batch, out_features) and y.dtype == x.dtype
    assert jnp.allclose(y, ref, atol=1e-4, rtol=1e-4)

    # 2) Default path: bf16 operands, f32 MXU accumulation.
    p_bf16 = prepare_share_linear_params(u_w, w_w, w_b, v_w)
    y_bf16 = jax.block_until_ready(share_linear_apply(x, p_bf16))
    assert jnp.allclose(y_bf16, ref, atol=5e-2, rtol=5e-2)

    # 3) Folded inference path: single matmul with W' = V W U, b' = V b.
    y_fold = jax.block_until_ready(
        share_linear(x, u_w, w_w, w_b, v_w,
                     compute_dtype=jnp.float32, fold_weights=True))
    assert jnp.allclose(y_fold, ref, atol=1e-4, rtol=1e-4)

    print("KERNEL_OK")
</pallas_src>

<mosaic_0001>
module attributes {stable_mosaic.version = 11 : i64} {
  func.func @_chain_kernel(%arg0: i32, %arg1: memref<8x32xf32, #tpu.memory_space<vmem>>, %arg2: memref<32x32xf32, #tpu.memory_space<vmem>>, %arg3: memref<32x64xf32, #tpu.memory_space<vmem>>, %arg4: memref<64x64xf32, #tpu.memory_space<vmem>>, %arg5: memref<1x64xf32, #tpu.memory_space<vmem>>, %arg6: memref<8x64xf32, #tpu.memory_space<vmem>>) attributes {dimension_semantics = [#tpu.dimension_semantics<parallel>], iteration_bounds = array<i64: 1>, scalar_prefetch = 0 : i64, scratch_operands = 0 : i64, tpu.core_type = #tpu.core_type<tc>, window_params = [{transform_indices = @transform_0, window_bounds = array<i64: 8, 32>}, {pipeline_mode = #tpu.pipeline_mode<synchronous>, transform_indices = @transform_1, window_bounds = array<i64: 32, 32>}, {pipeline_mode = #tpu.pipeline_mode<synchronous>, transform_indices = @transform_2, window_bounds = array<i64: 32, 64>}, {pipeline_mode = #tpu.pipeline_mode<synchronous>, transform_indices = @transform_3, window_bounds = array<i64: 64, 64>}, {pipeline_mode = #tpu.pipeline_mode<synchronous>, transform_indices = @transform_4, window_bounds = array<i64: 1, 64>}, {transform_indices = @transform_5, window_bounds = array<i64: 8, 64>}]} {
    %c0 = arith.constant 0 : index
    %c0_0 = arith.constant 0 : index
    %0 = vector.load %arg1[%c0, %c0_0] : memref<8x32xf32, #tpu.memory_space<vmem>>, vector<8x32xf32>
    %c0_1 = arith.constant 0 : index
    %c0_2 = arith.constant 0 : index
    %1 = vector.load %arg2[%c0_1, %c0_2] : memref<32x32xf32, #tpu.memory_space<vmem>>, vector<32x32xf32>
    %cst = arith.constant dense<0.000000e+00> : vector<8x32xf32>
    %2 = tpu.matmul %0, %1, %cst {dimension_numbers = #tpu.dot_dimension_numbers<[1], [0], [0], [1], [0, 0, 1, 1], [], []>} : vector<8x32xf32>, vector<32x32xf32>, vector<8x32xf32> -> vector<8x32xf32>
    %c0_3 = arith.constant 0 : index
    %c0_4 = arith.constant 0 : index
    %3 = vector.load %arg3[%c0_3, %c0_4] : memref<32x64xf32, #tpu.memory_space<vmem>>, vector<32x64xf32>
    %cst_5 = arith.constant dense<0.000000e+00> : vector<8x64xf32>
    %4 = tpu.matmul %2, %3, %cst_5 {dimension_numbers = #tpu.dot_dimension_numbers<[1], [0], [0], [1], [0, 0, 1, 1], [], []>} : vector<8x32xf32>, vector<32x64xf32>, vector<8x64xf32> -> vector<8x64xf32>
    %c0_6 = arith.constant 0 : index
    %c0_7 = arith.constant 0 : index
    %5 = vector.load %arg4[%c0_6, %c0_7] : memref<64x64xf32, #tpu.memory_space<vmem>>, vector<64x64xf32>
    %cst_8 = arith.constant dense<0.000000e+00> : vector<8x64xf32>
    %6 = tpu.matmul %4, %5, %cst_8 {dimension_numbers = #tpu.dot_dimension_numbers<[1], [0], [0], [1], [0, 0, 1, 1], [], []>} : vector<8x64xf32>, vector<64x64xf32>, vector<8x64xf32> -> vector<8x64xf32>
    %c0_9 = arith.constant 0 : index
    %c0_10 = arith.constant 0 : index
    %7 = vector.load %arg5[%c0_9, %c0_10] : memref<1x64xf32, #tpu.memory_space<vmem>>, vector<1x64xf32>
    %8 = vector.broadcast %7 : vector<1x64xf32> to vector<8x64xf32>
    %9 = arith.addf %6, %8 : vector<8x64xf32>
    %c0_11 = arith.constant 0 : index
    %c0_12 = arith.constant 0 : index
    %10 = vector.load %arg6[%c0_11, %c0_12] : memref<8x64xf32, #tpu.memory_space<vmem>>, vector<8x64xf32>
    tpu.vector_store %arg6[%c0_11, %c0_12], %9 {strides = array<i32>} : memref<8x64xf32, #tpu.memory_space<vmem>>, vector<8x64xf32>,
    return
  }
  func.func @transform_0(%arg0: i32) -> (i32, i32) {
    %c0_i32 = arith.constant 0 : i32
    %c0_i32_0 = arith.constant 0 : i32
    return %arg0, %c0_i32 : i32, i32
  }
  func.func @transform_1(%arg0: i32) -> (i32, i32) {
    %c0_i32 = arith.constant 0 : i32
    %c0_i32_0 = arith.constant 0 : i32
    %c0_i32_1 = arith.constant 0 : i32
    return %c0_i32, %c0_i32_0 : i32, i32
  }
  func.func @transform_2(%arg0: i32) -> (i32, i32) {
    %c0_i32 = arith.constant 0 : i32
    %c0_i32_0 = arith.constant 0 : i32
    %c0_i32_1 = arith.constant 0 : i32
    return %c0_i32, %c0_i32_0 : i32, i32
  }
  func.func @transform_3(%arg0: i32) -> (i32, i32) {
    %c0_i32 = arith.constant 0 : i32
    %c0_i32_0 = arith.constant 0 : i32
    %c0_i32_1 = arith.constant 0 : i32
    return %c0_i32, %c0_i32_0 : i32, i32
  }
  func.func @transform_4(%arg0: i32) -> (i32, i32) {
    %c0_i32 = arith.constant 0 : i32
    %c0_i32_0 = arith.constant 0 : i32
    %c0_i32_1 = arith.constant 0 : i32
    return %c0_i32, %c0_i32_0 : i32, i32
  }
  func.func @transform_5(%arg0: i32) -> (i32, i32) {
    %c0_i32 = arith.constant 0 : i32
    %c0_i32_0 = arith.constant 0 : i32
    return %arg0, %c0_i32 : i32, i32
  }
}

module attributes {stable_mosaic.version = 11 : i64} {
  func.func @_chain_kernel(%arg0: i32, %arg1: memref<8x32xf32, #tpu.memory_space<vmem>>, %arg2: memref<32x32xf32, #tpu.memory_space<vmem>>, %arg3: memref<32x64xf32, #tpu.memory_space<vmem>>, %arg4: memref<64x64xf32, #tpu.memory_space<vmem>>, %arg5: memref<1x64xf32, #tpu.memory_space<vmem>>, %arg6: memref<8x64xf32, #tpu.memory_space<vmem>>) attributes {dimension_semantics = [#tpu.dimension_semantics<parallel>], iteration_bounds = array<i64: 1>, scalar_prefetch = 0 : i64, scratch_operands = 0 : i64, tpu.core_type = #tpu.core_type<tc>, window_params = [{transform_indices = @transform_0, window_bounds = array<i64: 8, 32>}, {pipeline_mode = #tpu.pipeline_mode<synchronous>, transform_indices = @transform_1, window_bounds = array<i64: 32, 32>}, {pipeline_mode = #tpu.pipeline_mode<synchronous>, transform_indices = @transform_2, window_bounds = array<i64: 32, 64>}, {pipeline_mode = #tpu.pipeline_mode<synchronous>, transform_indices = @transform_3, window_bounds = array<i64: 64, 64>}, {pipeline_mode = #tpu.pipeline_mode<synchronous>, transform_indices = @transform_4, window_bounds = array<i64: 1, 64>}, {transform_indices = @transform_5, window_bounds = array<i64: 8, 64>}]} {
    %c0 = arith.constant 0 : index
    %c0_0 = arith.constant 0 : index
    %0 = vector.load %arg1[%c0, %c0_0] : memref<8x32xf32, #tpu.memory_space<vmem>>, vector<8x32xf32>
    %c0_1 = arith.constant 0 : index
    %c0_2 = arith.constant 0 : index
    %1 = vector.load %arg2[%c0_1, %c0_2] : memref<32x32xf32, #tpu.memory_space<vmem>>, vector<32x32xf32>
    %cst = arith.constant dense<0.000000e+00> : vector<8x32xf32>
    %2 = tpu.matmul %0, %1, %cst {dimension_numbers = #tpu.dot_dimension_numbers<[1], [0], [0], [1], [0, 0, 1, 1], [], []>} : vector<8x32xf32>, vector<32x32xf32>, vector<8x32xf32> -> vector<8x32xf32>
    %c0_3 = arith.constant 0 : index
    %c0_4 = arith.constant 0 : index
    %3 = vector.load %arg3[%c0_3, %c0_4] : memref<32x64xf32, #tpu.memory_space<vmem>>, vector<32x64xf32>
    %cst_5 = arith.constant dense<0.000000e+00> : vector<8x64xf32>
    %4 = tpu.matmul %2, %3, %cst_5 {dimension_numbers = #tpu.dot_dimension_numbers<[1], [0], [0], [1], [0, 0, 1, 1], [], []>} : vector<8x32xf32>, vector<32x64xf32>, vector<8x64xf32> -> vector<8x64xf32>
    %c0_6 = arith.constant 0 : index
    %c0_7 = arith.constant 0 : index
    %5 = vector.load %arg4[%c0_6, %c0_7] : memref<64x64xf32, #tpu.memory_space<vmem>>, vector<64x64xf32>
    %cst_8 = arith.constant dense<0.000000e+00> : vector<8x64xf32>
    %6 = tpu.matmul %4, %5, %cst_8 {dimension_numbers = #tpu.dot_dimension_numbers<[1], [0], [0], [1], [0, 0, 1, 1], [], []>} : vector<8x64xf32>, vector<64x64xf32>, vector<8x64xf32> -> vector<8x64xf32>
    %c0_9 = arith.constant 0 : index
    %c0_10 = arith.constant 0 : index
    %7 = vector.load %arg5[%c0_9, %c0_10] : memref<1x64xf32, #tpu.memory_space<vmem>>, vector<1x64xf32>
    %8 = vector.broadcast %7 : vector<1x64xf32> to vector<8x64xf32>
    %9 = arith.addf %6, %8 : vector<8x64xf32>
    %c0_11 = arith.constant 0 : index
    %c0_12 = arith.constant 0 : index
    %10 = vector.load %arg6[%c0_11, %c0_12] : memref<8x64xf32, #tpu.memory_space<vmem>>, vector<8x64xf32>
    tpu.vector_store %arg6[%c0_11, %c0_12], %9 {strides = array<i32>} : memref<8x64xf32, #tpu.memory_space<vmem>>, vector<8x64xf32>,
    return
  }
  func.func @transform_0(%arg0: i32) -> (i32, i32) {
    %c0_i32 = arith.constant 0 : i32
    %c0_i32_0 = arith.constant 0 : i32
    return %arg0, %c0_i32 : i32, i32
  }
  func.func @transform_1(%arg0: i32) -> (i32, i32) {
    %c0_i32 = arith.constant 0 : i32
    %c0_i32_0 = arith.constant 0 : i32
    %c0_i32_1 = arith.constant 0 : i32
    return %c0_i32, %c0_i32_0 : i32, i32
  }
  func.func @transform_2(%arg0: i32) -> (i32, i32) {
    %c0_i32 = arith.constant 0 : i32
    %c0_i32_0 = arith.constant 0 : i32
    %c0_i32_1 = arith.constant 0 : i32
    return %c0_i32, %c0_i32_0 : i32, i32
  }
  func.func @transform_3(%arg0: i32) -> (i32, i32) {
    %c0_i32 = arith.constant 0 : i32
    %c0_i32_0 = arith.constant 0 : i32
    %c0_i32_1 = arith.constant 0 : i32
    return %c0_i32, %c0_i32_0 : i32, i32
  }
  func.func @transform_4(%arg0: i32) -> (i32, i32) {
    %c0_i32 = arith.constant 0 : i32
    %c0_i32_0 = arith.constant 0 : i32
    %c0_i32_1 = arith.constant 0 : i32
    return %c0_i32, %c0_i32_0 : i32, i32
  }
  func.func @transform_5(%arg0: i32) -> (i32, i32) {
    %c0_i32 = arith.constant 0 : i32
    %c0_i32_0 = arith.constant 0 : i32
    return %arg0, %c0_i32 : i32, i32
  }
}

</mosaic_0001>

<llo_original>
// kernel: tpu_custom_call.1
$region0: #{tpu_custom_call.1}
  #allocation0 [shape = 'u32[]', space=smem, size = 0x4, offset = 0x4, fixed_abs, tag = 'smem constant byte address 0x4 - core index']
  #allocation1 [shape = 'u32[144,128]{1,0:T(1,128)}', space=vmem, size = 0x12000, scoped, tag = 'internal scratch']
  %s0 = inlined_call_operand.hbm [shape: f32[8,32], index: 0, kind: input, shape index: {}]
  %s1 = inlined_call_operand.hbm [shape: f32[32,32], index: 1, kind: input, shape index: {}]
  %s2 = inlined_call_operand.hbm [shape: f32[32,64], index: 2, kind: input, shape index: {}]
  %s3 = inlined_call_operand.hbm [shape: f32[64,64], index: 3, kind: input, shape index: {}]
  %s4 = inlined_call_operand.vmem [shape: f32[1,64], index: 4, kind: input, shape index: {}]
  %s5 = inlined_call_operand.hbm [shape: f32[8,64], index: 5, kind: output, shape index: {}]
  %s6 = sld [smem:[#allocation0]]
  $region46: #{tpu_custom_call.1} parent=0
    _
  %s8 = ssub.s32 1, %s6
  %s9 = scalar_select 0, %s8, %s6
  $region1: #{tpu_custom_call.1} parent=0
    #allocation2 [shape = 'u8[4096]{0}', space=vmem, size = 0x1000, scoped, tag = 'input window, operand 0, single buffered']
    #allocation3 [shape = 's32[1]{0}', space=sflag, size = 0x4, scoped, tag = 'scoped memory for tpu_custom_call.1']
    #allocation4 [shape = 's32[1]{0}', space=sflag, size = 0x4, scoped, tag = 'scoped memory for tpu_custom_call.1']
    #allocation5 [shape = 'u8[16384]{0}', space=vmem, size = 0x4000, scoped, tag = 'input window, operand 1, single buffered']
    #allocation6 [shape = 's32[1]{0}', space=sflag, size = 0x4, scoped, tag = 'scoped memory for tpu_custom_call.1']
    #allocation7 [shape = 'u8[16384]{0}', space=vmem, size = 0x4000, scoped, tag = 'input window, operand 2, single buffered']
    #allocation8 [shape = 'u8[32768]{0}', space=vmem, size = 0x8000, scoped, tag = 'input window, operand 3, single buffered']
    #allocation9 [shape = 's32[1]{0}', space=sflag, size = 0x4, scoped, tag = 'scoped memory for tpu_custom_call.1']
    #allocation10 [shape = 'u8[4096]{0}', space=vmem, size = 0x1000, scoped, tag = 'output window, operand 0, single buffered']
    %10 = vsyncpa [#allocation3], 0
    %11 = vsyncpa [#allocation6], 0
    %12 = vsyncpa [#allocation9], 0
    %13 = vsyncpa [#allocation4], 0
    // Predicated region
    $region2: #{tpu_custom_call.1} parent=1 // pred_check
      _
    $region3: #{tpu_custom_call.1} parent=1 // pred_check_branch
      %15 = sbr.rel (0) target = $region5
    $region4: #{tpu_custom_call.1} parent=1 // pred_region
      %s17 = ssub.s32 128, 128
      %18 = vsyncadd [#allocation3], %s17
      %s20 = sshll.u32 [#allocation2], 4
      %s21 = int_to_ptr.vmem [resolvable:$true] %s20
      %23 = dma.hbm_to_vmem [thread:$0]  %s0, 128, %s21, [#allocation3]
    $region5: #{tpu_custom_call.1} parent=1 // pred_fallthru
      _
    // Predicated region
    $region6: #{tpu_custom_call.1} parent=1 // pred_check
      _
    $region7: #{tpu_custom_call.1} parent=1 // pred_check_branch
      %25 = sbr.rel (0) target = $region9
    $region8: #{tpu_custom_call.1} parent=1 // pred_region
      %s27 = ssub.s32 512, 512
      %28 = vsyncadd [#allocation6], %s27
      %s29 = sshll.u32 [#allocation5], 4
      %s30 = int_to_ptr.vmem [resolvable:$true] %s29
      %35 = dma.hbm_to_vmem [thread:$0]  %s1, 512, %s30, [#allocation6], 128, 128, 8
    $region9: #{tpu_custom_call.1} parent=1 // pred_fallthru
      _
    // Predicated region
    $region10: #{tpu_custom_call.1} parent=1 // pred_check
      _
    $region11: #{tpu_custom_call.1} parent=1 // pred_check_branch
      %37 = sbr.rel (0) target = $region13
    $region12: #{tpu_custom_call.1} parent=1 // pred_region
      %s39 = ssub.s32 512, 512
      %40 = vsyncadd [#allocation6], %s39
      %s41 = sshll.u32 [#allocation7], 4
      %s42 = int_to_ptr.vmem [resolvable:$true] %s41
      %47 = dma.hbm_to_vmem [thread:$0]  %s2, 512, %s42, [#allocation6], 128, 128, 8
    $region13: #{tpu_custom_call.1} parent=1 // pred_fallthru
      _
    // Predicated region
    $region14: #{tpu_custom_call.1} parent=1 // pred_check
      _
    $region15: #{tpu_custom_call.1} parent=1 // pred_check_branch
      %49 = sbr.rel (0) target = $region17
    $region16: #{tpu_custom_call.1} parent=1 // pred_region
      %s51 = ssub.s32 1024, 1024
      %52 = vsyncadd [#allocation9], %s51
      %s53 = sshll.u32 [#allocation8], 4
      %s54 = int_to_ptr.vmem [resolvable:$true] %s53
      %59 = dma.hbm_to_vmem [thread:$0]  %s3, 1024, %s54, [#allocation9], 128, 128, 8
    $region17: #{tpu_custom_call.1} parent=1 // pred_fallthru
      _
    // Predicated region
    $region18: #{tpu_custom_call.1} parent=1 // pred_check
      _
    $region19: #{tpu_custom_call.1} parent=1 // pred_check_branch
      %61 = sbr.rel (0) target = $region21
    $region20: #{tpu_custom_call.1} parent=1 // pred_region
      _
    $region21: #{tpu_custom_call.1} parent=1 // pred_fallthru
      _
    // Predicated region
    $region22: #{tpu_custom_call.1} parent=1 // pred_check
      _
    $region23: #{tpu_custom_call.1} parent=1 // pred_check_branch
      %63 = sbr.rel (0) target = $region25
    $region24: #{tpu_custom_call.1} parent=1 // pred_region
      %64 = dma.done [#allocation3], 128
    $region25: #{tpu_custom_call.1} parent=1 // pred_fallthru
      _
    // Predicated region
    $region26: #{tpu_custom_call.1} parent=1 // pred_check
      _
    $region27: #{tpu_custom_call.1} parent=1 // pred_check_branch
      %66 = sbr.rel (0) target = $region29
    $region28: #{tpu_custom_call.1} parent=1 // pred_region
      %67 = dma.done [#allocation6], 512
    $region29: #{tpu_custom_call.1} parent=1 // pred_fallthru
      _
    // Predicated region
    $region30: #{tpu_custom_call.1} parent=1 // pred_check
      _
    $region31: #{tpu_custom_call.1} parent=1 // pred_check_branch
      %69 = sbr.rel (0) target = $region33
    $region32: #{tpu_custom_call.1} parent=1 // pred_region
      %70 = dma.done [#allocation6], 512
    $region33: #{tpu_custom_call.1} parent=1 // pred_fallthru
      _
    // Predicated region
    $region34: #{tpu_custom_call.1} parent=1 // pred_check
      _
    $region35: #{tpu_custom_call.1} parent=1 // pred_check_branch
      %72 = sbr.rel (0) target = $region37
    $region36: #{tpu_custom_call.1} parent=1 // pred_region
      %73 = dma.done [#allocation9], 1024
    $region37: #{tpu_custom_call.1} parent=1 // pred_fallthru
      _
    %v74 = vld [vmem:[#allocation2] sm:$0xff]
    %v75 = vld [vmem:[#allocation5] sm:$0xff]
    %v76 = vld [vmem:[#allocation5 + $0x8] sm:$0xff]
    %v77 = vld [vmem:[#allocation5 + $0x10] sm:$0xff]
    %v78 = vld [vmem:[#allocation5 + $0x18] sm:$0xff]
    %vm79 = vcmask 261120
    %v81 = vsel %vm79, %v74, 0
    %83 = vmatprep.subr.mxu0 0.0
    %84 = vmatpush1.msra.mxu0 0.0
    %85 = vmatprep.subr.mxu0 0.0
    %86 = vmatpush1.msra.mxu0 0.0
    %87 = vmatprep.subr.mxu0 0.0
    %88 = vmatpush1.msra.mxu0 0.0
    %89 = vmatprep.subr.mxu0 0.0
    %90 = vmatpush1.msra.mxu0 0.0
    %91 = vmatprep.subr.mxu0 0.0
    %92 = vmatpush1.msra.mxu0 0.0
    %93 = vmatprep.subr.mxu0 0.0
    %94 = vmatpush1.msra.mxu0 0.0
    %95 = vmatprep.subr.mxu0 0.0
    %96 = vmatpush1.msra.mxu0 0.0
    %97 = vmatprep.subr.mxu0 0.0
    %98 = vmatpush1.msra.mxu0 0.0
    %99 = vmatprep.subr.mxu0 0.0
    %100 = vmatpush1.msra.mxu0 0.0
    %101 = vmatprep.subr.mxu0 0.0
    %102 = vmatpush1.msra.mxu0 0.0
    %103 = vmatprep.subr.mxu0 0.0
    %104 = vmatpush1.msra.mxu0 0.0
    %105 = vmatprep.subr.mxu0 0.0
    %106 = vmatpush1.msra.mxu0 0.0
    %107 = vmatprep.subr.mxu0 0.0
    %108 = vmatpush1.msra.mxu0 %v78
    %109 = vmatprep.subr.mxu0 0.0
    %110 = vmatpush1.msra.mxu0 %v77
    %111 = vmatprep.subr.mxu0 0.0
    %112 = vmatpush1.msra.mxu0 %v76
    %113 = vmatprep.subr.mxu0 0.0
    %114 = vmatpush1.msra.mxu0 %v75
    %115 = vmatprep.subr.mxu0 0.0
    %116 = vmatpush2.msra.mxu0 0.0
    %117 = vmatprep.subr.mxu0 0.0
    %118 = vmatpush2.msra.mxu0 0.0
    %119 = vmatprep.subr.mxu0 0.0
    %120 = vmatpush2.msra.mxu0 0.0
    %121 = vmatprep.subr.mxu0 0.0
    %122 = vmatpush2.msra.mxu0 0.0
    %123 = vmatprep.subr.mxu0 0.0
    %124 = vmatpush2.msra.mxu0 0.0
    %125 = vmatprep.subr.mxu0 0.0
    %126 = vmatpush2.msra.mxu0 0.0
    %127 = vmatprep.subr.mxu0 0.0
    %128 = vmatpush2.msra.mxu0 0.0
    %129 = vmatprep.subr.mxu0 0.0
    %130 = vmatpush2.msra.mxu0 0.0
    %131 = vmatprep.subr.mxu0 0.0
    %132 = vmatpush2.msra.mxu0 0.0
    %133 = vmatprep.subr.mxu0 0.0
    %134 = vmatpush2.msra.mxu0 0.0
    %135 = vmatprep.subr.mxu0 0.0
    %136 = vmatpush2.msra.mxu0 0.0
    %137 = vmatprep.subr.mxu0 0.0
    %138 = vmatpush2.msra.mxu0 0.0
    %139 = vmatprep.subr.mxu0 0.0
    %140 = vmatpush2.msra.mxu0 0.0
    %141 = vmatprep.subr.mxu0 0.0
    %142 = vmatpush2.msra.mxu0 0.0
    %143 = vmatprep.subr.mxu0 0.0
    %144 = vmatpush2.msra.mxu0 0.0
    %145 = vmatprep.subr.mxu0 0.0
    %146 = vmatpush2.msra.mxu0 0.0
    %147 = vmatprep.mubr.f32.mxu0 0.0
    %148 = vmatmul.mubr.f32.gmra.mxu0 %v81
    %v149 = vpop.f32.mrf.mxu0
    %v150 = vadd.f32 0.0, %v149
    %v151 = vpop.f32.mrf.mxu0
    %152 = vdwg.mxu0
    %v153 = vld [vmem:[#allocation7] sm:$0xff]
    %v154 = vld [vmem:[#allocation7 + $0x8] sm:$0xff]
    %v155 = vld [vmem:[#allocation7 + $0x10] sm:$0xff]
    %v156 = vld [vmem:[#allocation7 + $0x18] sm:$0xff]
    %v158 = vsel %vm79, %v150, 0
    %160 = vmatprep.subr.mxu0 0.0
    %161 = vmatpush1.msra.mxu0 0.0
    %162 = vmatprep.subr.mxu0 0.0
    %163 = vmatpush1.msra.mxu0 0.0
    %164 = vmatprep.subr.mxu0 0.0
    %165 = vmatpush1.msra.mxu0 0.0
    %166 = vmatprep.subr.mxu0 0.0
    %167 = vmatpush1.msra.mxu0 0.0
    %168 = vmatprep.subr.mxu0 0.0
    %169 = vmatpush1.msra.mxu0 0.0
    %170 = vmatprep.subr.mxu0 0.0
    %171 = vmatpush1.msra.mxu0 0.0
    %172 = vmatprep.subr.mxu0 0.0
    %173 = vmatpush1.msra.mxu0 0.0
    %174 = vmatprep.subr.mxu0 0.0
    %175 = vmatpush1.msra.mxu0 0.0
    %176 = vmatprep.subr.mxu0 0.0
    %177 = vmatpush1.msra.mxu0 0.0
    %178 = vmatprep.subr.mxu0 0.0
    %179 = vmatpush1.msra.mxu0 0.0
    %180 = vmatprep.subr.mxu0 0.0
    %181 = vmatpush1.msra.mxu0 0.0
    %182 = vmatprep.subr.mxu0 0.0
    %183 = vmatpush1.msra.mxu0 0.0
    %184 = vmatprep.subr.mxu0 0.0
    %185 = vmatpush1.msra.mxu0 %v156
    %186 = vmatprep.subr.mxu0 0.0
    %187 = vmatpush1.msra.mxu0 %v155
    %188 = vmatprep.subr.mxu0 0.0
    %189 = vmatpush1.msra.mxu0 %v154
    %190 = vmatprep.subr.mxu0 0.0
    %191 = vmatpush1.msra.mxu0 %v153
    %192 = vmatprep.subr.mxu0 0.0
    %193 = vmatpush2.msra.mxu0 0.0
    %194 = vmatprep.subr.mxu0 0.0
    %195 = vmatpush2.msra.mxu0 0.0
    %196 = vmatprep.subr.mxu0 0.0
    %197 = vmatpush2.msra.mxu0 0.0
    %198 = vmatprep.subr.mxu0 0.0
    %199 = vmatpush2.msra.mxu0 0.0
    %200 = vmatprep.subr.mxu0 0.0
    %201 = vmatpush2.msra.mxu0 0.0
    %202 = vmatprep.subr.mxu0 0.0
    %203 = vmatpush2.msra.mxu0 0.0
    %204 = vmatprep.subr.mxu0 0.0
    %205 = vmatpush2.msra.mxu0 0.0
    %206 = vmatprep.subr.mxu0 0.0
    %207 = vmatpush2.msra.mxu0 0.0
    %208 = vmatprep.subr.mxu0 0.0
    %209 = vmatpush2.msra.mxu0 0.0
    %210 = vmatprep.subr.mxu0 0.0
    %211 = vmatpush2.msra.mxu0 0.0
    %212 = vmatprep.subr.mxu0 0.0
    %213 = vmatpush2.msra.mxu0 0.0
    %214 = vmatprep.subr.mxu0 0.0
    %215 = vmatpush2.msra.mxu0 0.0
    %216 = vmatprep.subr.mxu0 0.0
    %217 = vmatpush2.msra.mxu0 0.0
    %218 = vmatprep.subr.mxu0 0.0
    %219 = vmatpush2.msra.mxu0 0.0
    %220 = vmatprep.subr.mxu0 0.0
    %221 = vmatpush2.msra.mxu0 0.0
    %222 = vmatprep.subr.mxu0 0.0
    %223 = vmatpush2.msra.mxu0 0.0
    %224 = vmatprep.mubr.f32.mxu0 0.0
    %225 = vmatmul.mubr.f32.gmra.mxu0 %v158
    %v226 = vpop.f32.mrf.mxu0
    %v227 = vadd.f32 0.0, %v226
    %v228 = vpop.f32.mrf.mxu0
    %229 = vdwg.mxu0
    %v230 = vld [vmem:[#allocation8] sm:$0xff]
    %v231 = vld [vmem:[#allocation8 + $0x8] sm:$0xff]
    %v232 = vld [vmem:[#allocation8 + $0x10] sm:$0xff]
    %v233 = vld [vmem:[#allocation8 + $0x18] sm:$0xff]
    %v234 = vld [vmem:[#allocation8 + $0x20] sm:$0xff]
    %v235 = vld [vmem:[#allocation8 + $0x28] sm:$0xff]
    %v236 = vld [vmem:[#allocation8 + $0x30] sm:$0xff]
    %v237 = vld [vmem:[#allocation8 + $0x38] sm:$0xff]
    %v238 = vld [vmem:[%s4] sm:$0x1]
    %v240 = vlaneseq
    %v241 = vshrl.u32 %v240, 7
    %v242 = vsub.s32 0, %v241
    %v243 = vrot.slane %v238, %v242
    %vm245 = vcmask 523264
    %v247 = vsel %vm245, %v227, 0
    %249 = vmatprep.subr.mxu0 0.0
    %250 = vmatpush1.msra.mxu0 0.0
    %251 = vmatprep.subr.mxu0 0.0
    %252 = vmatpush1.msra.mxu0 0.0
    %253 = vmatprep.subr.mxu0 0.0
    %254 = vmatpush1.msra.mxu0 0.0
    %255 = vmatprep.subr.mxu0 0.0
    %256 = vmatpush1.msra.mxu0 0.0
    %257 = vmatprep.subr.mxu0 0.0
    %258 = vmatpush1.msra.mxu0 0.0
    %259 = vmatprep.subr.mxu0 0.0
    %260 = vmatpush1.msra.mxu0 0.0
    %261 = vmatprep.subr.mxu0 0.0
    %262 = vmatpush1.msra.mxu0 0.0
    %263 = vmatprep.subr.mxu0 0.0
    %264 = vmatpush1.msra.mxu0 0.0
    %265 = vmatprep.subr.mxu0 0.0
    %266 = vmatpush1.msra.mxu0 %v237
    %267 = vmatprep.subr.mxu0 0.0
    %268 = vmatpush1.msra.mxu0 %v236
    %269 = vmatprep.subr.mxu0 0.0
    %270 = vmatpush1.msra.mxu0 %v235
    %271 = vmatprep.subr.mxu0 0.0
    %272 = vmatpush1.msra.mxu0 %v234
    %273 = vmatprep.subr.mxu0 0.0
    %274 = vmatpush1.msra.mxu0 %v233
    %275 = vmatprep.subr.mxu0 0.0
    %276 = vmatpush1.msra.mxu0 %v232
    %277 = vmatprep.subr.mxu0 0.0
    %278 = vmatpush1.msra.mxu0 %v231
    %279 = vmatprep.subr.mxu0 0.0
    %280 = vmatpush1.msra.mxu0 %v230
    %281 = vmatprep.subr.mxu0 0.0
    %282 = vmatpush2.msra.mxu0 0.0
    %283 = vmatprep.subr.mxu0 0.0
    %284 = vmatpush2.msra.mxu0 0.0
    %285 = vmatprep.subr.mxu0 0.0
    %286 = vmatpush2.msra.mxu0 0.0
    %287 = vmatprep.subr.mxu0 0.0
    %288 = vmatpush2.msra.mxu0 0.0
    %289 = vmatprep.subr.mxu0 0.0
    %290 = vmatpush2.msra.mxu0 0.0
    %291 = vmatprep.subr.mxu0 0.0
    %292 = vmatpush2.msra.mxu0 0.0
    %293 = vmatprep.subr.mxu0 0.0
    %294 = vmatpush2.msra.mxu0 0.0
    %295 = vmatprep.subr.mxu0 0.0
    %296 = vmatpush2.msra.mxu0 0.0
    %297 = vmatprep.subr.mxu0 0.0
    %298 = vmatpush2.msra.mxu0 0.0
    %299 = vmatprep.subr.mxu0 0.0
    %300 = vmatpush2.msra.mxu0 0.0
    %301 = vmatprep.subr.mxu0 0.0
    %302 = vmatpush2.msra.mxu0 0.0
    %303 = vmatprep.subr.mxu0 0.0
    %304 = vmatpush2.msra.mxu0 0.0
    %305 = vmatprep.subr.mxu0 0.0
    %306 = vmatpush2.msra.mxu0 0.0
    %307 = vmatprep.subr.mxu0 0.0
    %308 = vmatpush2.msra.mxu0 0.0
    %309 = vmatprep.subr.mxu0 0.0
    %310 = vmatpush2.msra.mxu0 0.0
    %311 = vmatprep.subr.mxu0 0.0
    %312 = vmatpush2.msra.mxu0 0.0
    %313 = vmatprep.mubr.f32.mxu0 0.0
    %314 = vmatmul.mubr.f32.gmra.mxu0 %v247
    %v315 = vpop.f32.mrf.mxu0
    %v316 = vadd.f32 %v243, %v315
    %v317 = vpop.f32.mrf.mxu0
    %318 = vdwg.mxu0
    %319 = vst.msk [vmem:[#allocation10] sm:$0xff] %vm245, %v316
    // Predicated region
    $region38: #{tpu_custom_call.1} parent=1 // pred_check
      _
    $region39: #{tpu_custom_call.1} parent=1 // pred_check_branch
      %321 = sbr.rel (0) target = $region41
    $region40: #{tpu_custom_call.1} parent=1 // pred_region
      %s323 = ssub.s32 128, 128
      %324 = vsyncadd [#allocation4], %s323
      %s326 = sshll.u32 [#allocation10], 4
      %s327 = int_to_ptr.vmem [resolvable:$true] %s326
      %329 = dma.vmem_to_hbm [thread:$0]  %s327, 128, %s5, [#allocation4]
    $region41: #{tpu_custom_call.1} parent=1 // pred_fallthru
      _
    // Predicated region
    $region42: #{tpu_custom_call.1} parent=1 // pred_check
      _
    $region43: #{tpu_custom_call.1} parent=1 // pred_check_branch
      %331 = sbr.rel (0) target = $region45
    $region44: #{tpu_custom_call.1} parent=1 // pred_region
      %332 = dma.done [#allocation4], 128
    $region45: #{tpu_custom_call.1} parent=1 // pred_fallthru
      _
    %333 = vsyncpa [#allocation3], 1
    %334 = vsyncpa [#allocation6], 1
    %335 = vsyncpa [#allocation9], 1
    %336 = vsyncpa [#allocation4], 1

// kernel: tpu_custom_call.1
$region0: #{tpu_custom_call.1}
  #allocation0 [shape = 'u32[]', space=smem, size = 0x4, offset = 0x4, fixed_abs, tag = 'smem constant byte address 0x4 - core index']
  #allocation1 [shape = 'u32[144,128]{1,0:T(1,128)}', space=vmem, size = 0x12000, scoped, tag = 'internal scratch']
  %s0 = inlined_call_operand.hbm [shape: f32[8,32], index: 0, kind: input, shape index: {}]
  %s1 = inlined_call_operand.hbm [shape: f32[32,32], index: 1, kind: input, shape index: {}]
  %s2 = inlined_call_operand.hbm [shape: f32[32,64], index: 2, kind: input, shape index: {}]
  %s3 = inlined_call_operand.hbm [shape: f32[64,64], index: 3, kind: input, shape index: {}]
  %s4 = inlined_call_operand.vmem [shape: f32[1,64], index: 4, kind: input, shape index: {}]
  %s5 = inlined_call_operand.hbm [shape: f32[8,64], index: 5, kind: output, shape index: {}]
  %s6 = sld [smem:[#allocation0]]
  $region46: #{tpu_custom_call.1} parent=0
    _
  %s8 = ssub.s32 1, %s6
  %s9 = scalar_select 0, %s8, %s6
  $region1: #{tpu_custom_call.1} parent=0
    #allocation2 [shape = 'u8[4096]{0}', space=vmem, size = 0x1000, scoped, tag = 'input window, operand 0, single buffered']
    #allocation3 [shape = 's32[1]{0}', space=sflag, size = 0x4, scoped, tag = 'scoped memory for tpu_custom_call.1']
    #allocation4 [shape = 's32[1]{0}', space=sflag, size = 0x4, scoped, tag = 'scoped memory for tpu_custom_call.1']
    #allocation5 [shape = 'u8[16384]{0}', space=vmem, size = 0x4000, scoped, tag = 'input window, operand 1, single buffered']
    #allocation6 [shape = 's32[1]{0}', space=sflag, size = 0x4, scoped, tag = 'scoped memory for tpu_custom_call.1']
    #allocation7 [shape = 'u8[16384]{0}', space=vmem, size = 0x4000, scoped, tag = 'input window, operand 2, single buffered']
    #allocation8 [shape = 'u8[32768]{0}', space=vmem, size = 0x8000, scoped, tag = 'input window, operand 3, single buffered']
    #allocation9 [shape = 's32[1]{0}', space=sflag, size = 0x4, scoped, tag = 'scoped memory for tpu_custom_call.1']
    #allocation10 [shape = 'u8[4096]{0}', space=vmem, size = 0x1000, scoped, tag = 'output window, operand 0, single buffered']
    %10 = vsyncpa [#allocation3], 0
    %11 = vsyncpa [#allocation6], 0
    %12 = vsyncpa [#allocation9], 0
    %13 = vsyncpa [#allocation4], 0
    // Predicated region
    $region2: #{tpu_custom_call.1} parent=1 // pred_check
      _
    $region3: #{tpu_custom_call.1} parent=1 // pred_check_branch
      %15 = sbr.rel (0) target = $region5
    $region4: #{tpu_custom_call.1} parent=1 // pred_region
      %s17 = ssub.s32 128, 128
      %18 = vsyncadd [#allocation3], %s17
      %s20 = sshll.u32 [#allocation2], 4
      %s21 = int_to_ptr.vmem [resolvable:$true] %s20
      %23 = dma.hbm_to_vmem [thread:$0]  %s0, 128, %s21, [#allocation3]
    $region5: #{tpu_custom_call.1} parent=1 // pred_fallthru
      _
    // Predicated region
    $region6: #{tpu_custom_call.1} parent=1 // pred_check
      _
    $region7: #{tpu_custom_call.1} parent=1 // pred_check_branch
      %25 = sbr.rel (0) target = $region9
    $region8: #{tpu_custom_call.1} parent=1 // pred_region
      %s27 = ssub.s32 512, 512
      %28 = vsyncadd [#allocation6], %s27
      %s29 = sshll.u32 [#allocation5], 4
      %s30 = int_to_ptr.vmem [resolvable:$true] %s29
      %35 = dma.hbm_to_vmem [thread:$0]  %s1, 512, %s30, [#allocation6], 128, 128, 8
    $region9: #{tpu_custom_call.1} parent=1 // pred_fallthru
      _
    // Predicated region
    $region10: #{tpu_custom_call.1} parent=1 // pred_check
      _
    $region11: #{tpu_custom_call.1} parent=1 // pred_check_branch
      %37 = sbr.rel (0) target = $region13
    $region12: #{tpu_custom_call.1} parent=1 // pred_region
      %s39 = ssub.s32 512, 512
      %40 = vsyncadd [#allocation6], %s39
      %s41 = sshll.u32 [#allocation7], 4
      %s42 = int_to_ptr.vmem [resolvable:$true] %s41
      %47 = dma.hbm_to_vmem [thread:$0]  %s2, 512, %s42, [#allocation6], 128, 128, 8
    $region13: #{tpu_custom_call.1} parent=1 // pred_fallthru
      _
    // Predicated region
    $region14: #{tpu_custom_call.1} parent=1 // pred_check
      _
    $region15: #{tpu_custom_call.1} parent=1 // pred_check_branch
      %49 = sbr.rel (0) target = $region17
    $region16: #{tpu_custom_call.1} parent=1 // pred_region
      %s51 = ssub.s32 1024, 1024
      %52 = vsyncadd [#allocation9], %s51
      %s53 = sshll.u32 [#allocation8], 4
      %s54 = int_to_ptr.vmem [resolvable:$true] %s53
      %59 = dma.hbm_to_vmem [thread:$0]  %s3, 1024, %s54, [#allocation9], 128, 128, 8
    $region17: #{tpu_custom_call.1} parent=1 // pred_fallthru
      _
    // Predicated region
    $region18: #{tpu_custom_call.1} parent=1 // pred_check
      _
    $region19: #{tpu_custom_call.1} parent=1 // pred_check_branch
      %61 = sbr.rel (0) target = $region21
    $region20: #{tpu_custom_call.1} parent=1 // pred_region
      _
    $region21: #{tpu_custom_call.1} parent=1 // pred_fallthru
      _
    // Predicated region
    $region22: #{tpu_custom_call.1} parent=1 // pred_check
      _
    $region23: #{tpu_custom_call.1} parent=1 // pred_check_branch
      %63 = sbr.rel (0) target = $region25
    $region24: #{tpu_custom_call.1} parent=1 // pred_region
      %64 = dma.done [#allocation3], 128
    $region25: #{tpu_custom_call.1} parent=1 // pred_fallthru
      _
    // Predicated region
    $region26: #{tpu_custom_call.1} parent=1 // pred_check
      _
    $region27: #{tpu_custom_call.1} parent=1 // pred_check_branch
      %66 = sbr.rel (0) target = $region29
    $region28: #{tpu_custom_call.1} parent=1 // pred_region
      %67 = dma.done [#allocation6], 512
    $region29: #{tpu_custom_call.1} parent=1 // pred_fallthru
      _
    // Predicated region
    $region30: #{tpu_custom_call.1} parent=1 // pred_check
      _
    $region31: #{tpu_custom_call.1} parent=1 // pred_check_branch
      %69 = sbr.rel (0) target = $region33
    $region32: #{tpu_custom_call.1} parent=1 // pred_region
      %70 = dma.done [#allocation6], 512
    $region33: #{tpu_custom_call.1} parent=1 // pred_fallthru
      _
    // Predicated region
    $region34: #{tpu_custom_call.1} parent=1 // pred_check
      _
    $region35: #{tpu_custom_call.1} parent=1 // pred_check_branch
      %72 = sbr.rel (0) target = $region37
    $region36: #{tpu_custom_call.1} parent=1 // pred_region
      %73 = dma.done [#allocation9], 1024
    $region37: #{tpu_custom_call.1} parent=1 // pred_fallthru
      _
    %v74 = vld [vmem:[#allocation2] sm:$0xff]
    %v75 = vld [vmem:[#allocation5] sm:$0xff]
    %v76 = vld [vmem:[#allocation5 + $0x8] sm:$0xff]
    %v77 = vld [vmem:[#allocation5 + $0x10] sm:$0xff]
    %v78 = vld [vmem:[#allocation5 + $0x18] sm:$0xff]
    %vm79 = vcmask 261120
    %v81 = vsel %vm79, %v74, 0
    %83 = vmatprep.subr.mxu0 0.0
    %84 = vmatpush1.msra.mxu0 0.0
    %85 = vmatprep.subr.mxu0 0.0
    %86 = vmatpush1.msra.mxu0 0.0
    %87 = vmatprep.subr.mxu0 0.0
    %88 = vmatpush1.msra.mxu0 0.0
    %89 = vmatprep.subr.mxu0 0.0
    %90 = vmatpush1.msra.mxu0 0.0
    %91 = vmatprep.subr.mxu0 0.0
    %92 = vmatpush1.msra.mxu0 0.0
    %93 = vmatprep.subr.mxu0 0.0
    %94 = vmatpush1.msra.mxu0 0.0
    %95 = vmatprep.subr.mxu0 0.0
    %96 = vmatpush1.msra.mxu0 0.0
    %97 = vmatprep.subr.mxu0 0.0
    %98 = vmatpush1.msra.mxu0 0.0
    %99 = vmatprep.subr.mxu0 0.0
    %100 = vmatpush1.msra.mxu0 0.0
    %101 = vmatprep.subr.mxu0 0.0
    %102 = vmatpush1.msra.mxu0 0.0
    %103 = vmatprep.subr.mxu0 0.0
    %104 = vmatpush1.msra.mxu0 0.0
    %105 = vmatprep.subr.mxu0 0.0
    %106 = vmatpush1.msra.mxu0 0.0
    %107 = vmatprep.subr.mxu0 0.0
    %108 = vmatpush1.msra.mxu0 %v78
    %109 = vmatprep.subr.mxu0 0.0
    %110 = vmatpush1.msra.mxu0 %v77
    %111 = vmatprep.subr.mxu0 0.0
    %112 = vmatpush1.msra.mxu0 %v76
    %113 = vmatprep.subr.mxu0 0.0
    %114 = vmatpush1.msra.mxu0 %v75
    %115 = vmatprep.subr.mxu0 0.0
    %116 = vmatpush2.msra.mxu0 0.0
    %117 = vmatprep.subr.mxu0 0.0
    %118 = vmatpush2.msra.mxu0 0.0
    %119 = vmatprep.subr.mxu0 0.0
    %120 = vmatpush2.msra.mxu0 0.0
    %121 = vmatprep.subr.mxu0 0.0
    %122 = vmatpush2.msra.mxu0 0.0
    %123 = vmatprep.subr.mxu0 0.0
    %124 = vmatpush2.msra.mxu0 0.0
    %125 = vmatprep.subr.mxu0 0.0
    %126 = vmatpush2.msra.mxu0 0.0
    %127 = vmatprep.subr.mxu0 0.0
    %128 = vmatpush2.msra.mxu0 0.0
    %129 = vmatprep.subr.mxu0 0.0
    %130 = vmatpush2.msra.mxu0 0.0
    %131 = vmatprep.subr.mxu0 0.0
    %132 = vmatpush2.msra.mxu0 0.0
    %133 = vmatprep.subr.mxu0 0.0
    %134 = vmatpush2.msra.mxu0 0.0
    %135 = vmatprep.subr.mxu0 0.0
    %136 = vmatpush2.msra.mxu0 0.0
    %137 = vmatprep.subr.mxu0 0.0
    %138 = vmatpush2.msra.mxu0 0.0
    %139 = vmatprep.subr.mxu0 0.0
    %140 = vmatpush2.msra.mxu0 0.0
    %141 = vmatprep.subr.mxu0 0.0
    %142 = vmatpush2.msra.mxu0 0.0
    %143 = vmatprep.subr.mxu0 0.0
    %144 = vmatpush2.msra.mxu0 0.0
    %145 = vmatprep.subr.mxu0 0.0
    %146 = vmatpush2.msra.mxu0 0.0
    %147 = vmatprep.mubr.f32.mxu0 0.0
    %148 = vmatmul.mubr.f32.gmra.mxu0 %v81
    %v149 = vpop.f32.mrf.mxu0
    %v150 = vadd.f32 0.0, %v149
    %v151 = vpop.f32.mrf.mxu0
    %152 = vdwg.mxu0
    %v153 = vld [vmem:[#allocation7] sm:$0xff]
    %v154 = vld [vmem:[#allocation7 + $0x8] sm:$0xff]
    %v155 = vld [vmem:[#allocation7 + $0x10] sm:$0xff]
    %v156 = vld [vmem:[#allocation7 + $0x18] sm:$0xff]
    %v158 = vsel %vm79, %v150, 0
    %160 = vmatprep.subr.mxu0 0.0
    %161 = vmatpush1.msra.mxu0 0.0
    %162 = vmatprep.subr.mxu0 0.0
    %163 = vmatpush1.msra.mxu0 0.0
    %164 = vmatprep.subr.mxu0 0.0
    %165 = vmatpush1.msra.mxu0 0.0
    %166 = vmatprep.subr.mxu0 0.0
    %167 = vmatpush1.msra.mxu0 0.0
    %168 = vmatprep.subr.mxu0 0.0
    %169 = vmatpush1.msra.mxu0 0.0
    %170 = vmatprep.subr.mxu0 0.0
    %171 = vmatpush1.msra.mxu0 0.0
    %172 = vmatprep.subr.mxu0 0.0
    %173 = vmatpush1.msra.mxu0 0.0
    %174 = vmatprep.subr.mxu0 0.0
    %175 = vmatpush1.msra.mxu0 0.0
    %176 = vmatprep.subr.mxu0 0.0
    %177 = vmatpush1.msra.mxu0 0.0
    %178 = vmatprep.subr.mxu0 0.0
    %179 = vmatpush1.msra.mxu0 0.0
    %180 = vmatprep.subr.mxu0 0.0
    %181 = vmatpush1.msra.mxu0 0.0
    %182 = vmatprep.subr.mxu0 0.0
    %183 = vmatpush1.msra.mxu0 0.0
    %184 = vmatprep.subr.mxu0 0.0
    %185 = vmatpush1.msra.mxu0 %v156
    %186 = vmatprep.subr.mxu0 0.0
    %187 = vmatpush1.msra.mxu0 %v155
    %188 = vmatprep.subr.mxu0 0.0
    %189 = vmatpush1.msra.mxu0 %v154
    %190 = vmatprep.subr.mxu0 0.0
    %191 = vmatpush1.msra.mxu0 %v153
    %192 = vmatprep.subr.mxu0 0.0
    %193 = vmatpush2.msra.mxu0 0.0
    %194 = vmatprep.subr.mxu0 0.0
    %195 = vmatpush2.msra.mxu0 0.0
    %196 = vmatprep.subr.mxu0 0.0
    %197 = vmatpush2.msra.mxu0 0.0
    %198 = vmatprep.subr.mxu0 0.0
    %199 = vmatpush2.msra.mxu0 0.0
    %200 = vmatprep.subr.mxu0 0.0
    %201 = vmatpush2.msra.mxu0 0.0
    %202 = vmatprep.subr.mxu0 0.0
    %203 = vmatpush2.msra.mxu0 0.0
    %204 = vmatprep.subr.mxu0 0.0
    %205 = vmatpush2.msra.mxu0 0.0
    %206 = vmatprep.subr.mxu0 0.0
    %207 = vmatpush2.msra.mxu0 0.0
    %208 = vmatprep.subr.mxu0 0.0
    %209 = vmatpush2.msra.mxu0 0.0
    %210 = vmatprep.subr.mxu0 0.0
    %211 = vmatpush2.msra.mxu0 0.0
    %212 = vmatprep.subr.mxu0 0.0
    %213 = vmatpush2.msra.mxu0 0.0
    %214 = vmatprep.subr.mxu0 0.0
    %215 = vmatpush2.msra.mxu0 0.0
    %216 = vmatprep.subr.mxu0 0.0
    %217 = vmatpush2.msra.mxu0 0.0
    %218 = vmatprep.subr.mxu0 0.0
    %219 = vmatpush2.msra.mxu0 0.0
    %220 = vmatprep.subr.mxu0 0.0
    %221 = vmatpush2.msra.mxu0 0.0
    %222 = vmatprep.subr.mxu0 0.0
    %223 = vmatpush2.msra.mxu0 0.0
    %224 = vmatprep.mubr.f32.mxu0 0.0
    %225 = vmatmul.mubr.f32.gmra.mxu0 %v158
    %v226 = vpop.f32.mrf.mxu0
    %v227 = vadd.f32 0.0, %v226
    %v228 = vpop.f32.mrf.mxu0
    %229 = vdwg.mxu0
    %v230 = vld [vmem:[#allocation8] sm:$0xff]
    %v231 = vld [vmem:[#allocation8 + $0x8] sm:$0xff]
    %v232 = vld [vmem:[#allocation8 + $0x10] sm:$0xff]
    %v233 = vld [vmem:[#allocation8 + $0x18] sm:$0xff]
    %v234 = vld [vmem:[#allocation8 + $0x20] sm:$0xff]
    %v235 = vld [vmem:[#allocation8 + $0x28] sm:$0xff]
    %v236 = vld [vmem:[#allocation8 + $0x30] sm:$0xff]
    %v237 = vld [vmem:[#allocation8 + $0x38] sm:$0xff]
    %v238 = vld [vmem:[%s4] sm:$0x1]
    %v240 = vlaneseq
    %v241 = vshrl.u32 %v240, 7
    %v242 = vsub.s32 0, %v241
    %v243 = vrot.slane %v238, %v242
    %vm245 = vcmask 523264
    %v247 = vsel %vm245, %v227, 0
    %249 = vmatprep.subr.mxu0 0.0
    %250 = vmatpush1.msra.mxu0 0.0
    %251 = vmatprep.subr.mxu0 0.0
    %252 = vmatpush1.msra.mxu0 0.0
    %253 = vmatprep.subr.mxu0 0.0
    %254 = vmatpush1.msra.mxu0 0.0
    %255 = vmatprep.subr.mxu0 0.0
    %256 = vmatpush1.msra.mxu0 0.0
    %257 = vmatprep.subr.mxu0 0.0
    %258 = vmatpush1.msra.mxu0 0.0
    %259 = vmatprep.subr.mxu0 0.0
    %260 = vmatpush1.msra.mxu0 0.0
    %261 = vmatprep.subr.mxu0 0.0
    %262 = vmatpush1.msra.mxu0 0.0
    %263 = vmatprep.subr.mxu0 0.0
    %264 = vmatpush1.msra.mxu0 0.0
    %265 = vmatprep.subr.mxu0 0.0
    %266 = vmatpush1.msra.mxu0 %v237
    %267 = vmatprep.subr.mxu0 0.0
    %268 = vmatpush1.msra.mxu0 %v236
    %269 = vmatprep.subr.mxu0 0.0
    %270 = vmatpush1.msra.mxu0 %v235
    %271 = vmatprep.subr.mxu0 0.0
    %272 = vmatpush1.msra.mxu0 %v234
    %273 = vmatprep.subr.mxu0 0.0
    %274 = vmatpush1.msra.mxu0 %v233
    %275 = vmatprep.subr.mxu0 0.0
    %276 = vmatpush1.msra.mxu0 %v232
    %277 = vmatprep.subr.mxu0 0.0
    %278 = vmatpush1.msra.mxu0 %v231
    %279 = vmatprep.subr.mxu0 0.0
    %280 = vmatpush1.msra.mxu0 %v230
    %281 = vmatprep.subr.mxu0 0.0
    %282 = vmatpush2.msra.mxu0 0.0
    %283 = vmatprep.subr.mxu0 0.0
    %284 = vmatpush2.msra.mxu0 0.0
    %285 = vmatprep.subr.mxu0 0.0
    %286 = vmatpush2.msra.mxu0 0.0
    %287 = vmatprep.subr.mxu0 0.0
    %288 = vmatpush2.msra.mxu0 0.0
    %289 = vmatprep.subr.mxu0 0.0
    %290 = vmatpush2.msra.mxu0 0.0
    %291 = vmatprep.subr.mxu0 0.0
    %292 = vmatpush2.msra.mxu0 0.0
    %293 = vmatprep.subr.mxu0 0.0
    %294 = vmatpush2.msra.mxu0 0.0
    %295 = vmatprep.subr.mxu0 0.0
    %296 = vmatpush2.msra.mxu0 0.0
    %297 = vmatprep.subr.mxu0 0.0
    %298 = vmatpush2.msra.mxu0 0.0
    %299 = vmatprep.subr.mxu0 0.0
    %300 = vmatpush2.msra.mxu0 0.0
    %301 = vmatprep.subr.mxu0 0.0
    %302 = vmatpush2.msra.mxu0 0.0
    %303 = vmatprep.subr.mxu0 0.0
    %304 = vmatpush2.msra.mxu0 0.0
    %305 = vmatprep.subr.mxu0 0.0
    %306 = vmatpush2.msra.mxu0 0.0
    %307 = vmatprep.subr.mxu0 0.0
    %308 = vmatpush2.msra.mxu0 0.0
    %309 = vmatprep.subr.mxu0 0.0
    %310 = vmatpush2.msra.mxu0 0.0
    %311 = vmatprep.subr.mxu0 0.0
    %312 = vmatpush2.msra.mxu0 0.0
    %313 = vmatprep.mubr.f32.mxu0 0.0
    %314 = vmatmul.mubr.f32.gmra.mxu0 %v247
    %v315 = vpop.f32.mrf.mxu0
    %v316 = vadd.f32 %v243, %v315
    %v317 = vpop.f32.mrf.mxu0
    %318 = vdwg.mxu0
    %319 = vst.msk [vmem:[#allocation10] sm:$0xff] %vm245, %v316
    // Predicated region
    $region38: #{tpu_custom_call.1} parent=1 // pred_check
      _
    $region39: #{tpu_custom_call.1} parent=1 // pred_check_branch
      %321 = sbr.rel (0) target = $region41
    $region40: #{tpu_custom_call.1} parent=1 // pred_region
      %s323 = ssub.s32 128, 128
      %324 = vsyncadd [#allocation4], %s323
      %s326 = sshll.u32 [#allocation10], 4
      %s327 = int_to_ptr.vmem [resolvable:$true] %s326
      %329 = dma.vmem_to_hbm [thread:$0]  %s327, 128, %s5, [#allocation4]
    $region41: #{tpu_custom_call.1} parent=1 // pred_fallthru
      _
    // Predicated region
    $region42: #{tpu_custom_call.1} parent=1 // pred_check
      _
    $region43: #{tpu_custom_call.1} parent=1 // pred_check_branch
      %331 = sbr.rel (0) target = $region45
    $region44: #{tpu_custom_call.1} parent=1 // pred_region
      %332 = dma.done [#allocation4], 128
    $region45: #{tpu_custom_call.1} parent=1 // pred_fallthru
      _
    %333 = vsyncpa [#allocation3], 1
    %334 = vsyncpa [#allocation6], 1
    %335 = vsyncpa [#allocation9], 1
    %336 = vsyncpa [#allocation4], 1

</llo_original>
